<compile_context>
chip_gen: v7x
topology: tpu7x:2x2x1
jax: 0.10.0
libtpu: 0.0.40
codegen_flags: <defaults>
</compile_context>

<pallas_src>
import functools
import math

import jax
import jax.numpy as jnp
from jax.experimental import pallas as pl
from jax.experimental.pallas import tpu as pltpu

_LANE = 128
_MAX_D_TILE = 32 * 1024  # lanes per D block; safe for v5e/v6e/v7x scoped VMEM


def _round_up(x, m):
    return (x + m - 1) // m * m


def _row_tile_for(*dtypes):
    # native sublane packing: 8 rows for 32-bit, 16 for 16-bit, 32 for 8-bit
    itemsize = min(jnp.dtype(d).itemsize for d in dtypes)
    if itemsize == 1:
        return 32
    if itemsize == 2:
        return 16
    return 8


# --------------------------------------------------------------------------
# Kernels
# --------------------------------------------------------------------------
def _accumulate(acc_ref, vals, *, d_valid, d_tile):
    """Add `vals` into acc_ref; mask the (statically known) partial last tile."""
    j = pl.program_id(1)
    nj = pl.num_programs(1)

    if d_valid % d_tile != 0:          # static decision at trace time
        @pl.when(j < nj - 1)
        def _full():
            acc_ref[...] += vals

        @pl.when(j == nj - 1)
        def _partial():
            lane = jax.lax.broadcasted_iota(jnp.int32, vals.shape, 1) + j * d_tile
            acc_ref[...] += jnp.where(lane < d_valid, vals, 0.0)
    else:
        acc_ref[...] += vals


def _sse_kernel(x_ref, t_ref, o_ref, acc_ref, *, d_valid):
    """Row-wise sum of squared error; D axis tiled along grid dim 1."""
    j = pl.program_id(1)
    nj = pl.num_programs(1)
    d_tile = x_ref.shape[-1]

    @pl.when(j == 0)
    def _init():
        acc_ref[...] = jnp.zeros_like(acc_ref)

    diff = x_ref[...].astype(jnp.float32) - t_ref[...].astype(jnp.float32)
    _accumulate(acc_ref, diff * diff, d_valid=d_valid, d_tile=d_tile)

    @pl.when(j == nj - 1)
    def _store():
        o_ref[...] = jnp.sum(acc_ref[...], axis=-1, keepdims=True)


def _sumlog_kernel(v_ref, o_ref, acc_ref, *, d_valid):
    """Row-wise sum of log(v); D axis tiled along grid dim 1."""
    j = pl.program_id(1)
    nj = pl.num_programs(1)
    d_tile = v_ref.shape[-1]

    @pl.when(j == 0)
    def _init():
        acc_ref[...] = jnp.zeros_like(acc_ref)

    logs = jnp.log(v_ref[...].astype(jnp.float32))   # EUP slot, overlaps DMA
    _accumulate(acc_ref, logs, d_valid=d_valid, d_tile=d_tile)

    @pl.when(j == nj - 1)
    def _store():
        o_ref[...] = jnp.sum(acc_ref[...], axis=-1, keepdims=True)


# --------------------------------------------------------------------------
# Wrappers
# --------------------------------------------------------------------------
def pallas_sse_rows(x, t, *, max_d_tile=_MAX_D_TILE):
    """x, t: [R, D] -> [R] f32, sum over D of (x - t)^2 (f32 accumulation)."""
    assert x.shape == t.shape
    R, D = x.shape
    row_tile = _row_tile_for(x.dtype, t.dtype)
    d_tile = min(_round_up(D, _LANE), _round_up(max_d_tile, _LANE))
    n_rb = pl.cdiv(R, row_tile)
    n_db = pl.cdiv(D, d_tile)

    out = pl.pallas_call(
        functools.partial(_sse_kernel, d_valid=D),
        out_shape=jax.ShapeDtypeStruct((n_rb * row_tile, 1), jnp.float32),
        grid=(n_rb, n_db),
        in_specs=[
            pl.BlockSpec((row_tile, d_tile), lambda i, j: (i, j)),
            pl.BlockSpec((row_tile, d_tile), lambda i, j: (i, j)),
        ],
        out_specs=pl.BlockSpec((row_tile, 1), lambda i, j: (i, 0)),
        scratch_shapes=[pltpu.VMEM((row_tile, d_tile), jnp.float32)],
        compiler_params=pltpu.CompilerParams(
            dimension_semantics=("parallel", "arbitrary")),
    )(x, t)
    return out[:R, 0]


def pallas_sumlog_rows(v, *, max_d_tile=_MAX_D_TILE):
    """v: [R, D] (strictly positive) -> [R] f32 sum over D of log(v)."""
    R, D = v.shape
    row_tile = _row_tile_for(v.dtype)
    d_tile = min(_round_up(D, _LANE), _round_up(max_d_tile, _LANE))
    n_rb = pl.cdiv(R, row_tile)
    n_db = pl.cdiv(D, d_tile)

    out = pl.pallas_call(
        functools.partial(_sumlog_kernel, d_valid=D),
        out_shape=jax.ShapeDtypeStruct((n_rb * row_tile, 1), jnp.float32),
        grid=(n_rb, n_db),
        in_specs=[pl.BlockSpec((row_tile, d_tile), lambda i, j: (i, j))],
        out_specs=pl.BlockSpec((row_tile, 1), lambda i, j: (i, 0)),
        scratch_shapes=[pltpu.VMEM((row_tile, d_tile), jnp.float32)],
        compiler_params=pltpu.CompilerParams(
            dimension_semantics=("parallel", "arbitrary")),
    )(v)
    return out[:R, 0]


# --------------------------------------------------------------------------
# RateDistortionLoss forward (return_details=False)
# --------------------------------------------------------------------------
def rate_distortion_loss(x_hat_list, target_list, likelihoods_list,
                         lmbda=0.01, bitdepth=8, max_d_tile=_MAX_D_TILE):
    """JAX/Pallas equivalent of RateDistortionLoss.forward.

    x_hat_list / target_list: lists of NCHW frames (same shape per frame).
    likelihoods_list: list (per frame) of {label: {field: tensor[N, ...]}}.
    Returns dict with 'loss', 'mse_loss', 'bpp_loss', 'distortion' scalars.
    """
    # TODO(synk): return_details=True bookkeeping (bpp_info_dict / per-frame
    # entries) is host-side dict plumbing and is not implemented here.
    assert len(x_hat_list) == len(target_list)
    num_frames = len(target_list)
    N, C, H, W = target_list[0].shape
    num_pixels = H * W * num_frames
    scale = float((2 ** bitdepth - 1) ** 2)
    D = C * H * W

    # ---- distortion: one fused SSE kernel over all frames --------------
    xh = jnp.stack(x_hat_list).reshape(num_frames * N, D)   # native dtype
    tg = jnp.stack(target_list).reshape(num_frames * N, D)  # native dtype
    sse = pallas_sse_rows(xh, tg, max_d_tile=max_d_tile)     # [F*N]
    mse = sse.reshape(num_frames, N) / float(D)              # per (frame, sample)

    mse_loss = mse.mean()
    scaled_distortion = scale * mse.mean(axis=0)              # [N]

    # ---- rate: one fused sum-log kernel over all likelihood fields -----
    flat = []
    for frame_likelihoods in likelihoods_list:
        for _label, fields in frame_likelihoods.items():
            for _field, v in fields.items():
                flat.append(v.reshape(v.shape[0], -1))
    if flat:
        common = jnp.result_type(*[f.dtype for f in flat])
        lk = jnp.concatenate([f.astype(common) for f in flat], axis=1)  # [N, total]
        slog = pallas_sumlog_rows(lk, max_d_tile=max_d_tile)            # [N]
        bpp_loss_vec = slog / (-math.log(2) * num_pixels)
    else:
        bpp_loss_vec = jnp.zeros((N,), jnp.float32)

    bpp_loss = bpp_loss_vec.mean()
    loss = (lmbda * scaled_distortion).mean() + bpp_loss

    return {
        "loss": loss,
        "mse_loss": mse_loss,
        "bpp_loss": bpp_loss,
        "distortion": scaled_distortion.mean(),
    }


# --------------------------------------------------------------------------
# Self test
# --------------------------------------------------------------------------
if __name__ == "__main__":
    key = jax.random.PRNGKey(0)
    num_frames, N, C, H, W = 2, 2, 4, 16, 16
    lmbda, bitdepth = 0.01, 8

    keys = jax.random.split(key, 16)
    ki = iter(keys)

    x_hat_list = [jax.random.uniform(next(ki), (N, C, H, W), jnp.float32)
                  for _ in range(num_frames)]
    target_list = [jax.random.uniform(next(ki), (N, C, H, W), jnp.float32)
                   for _ in range(num_frames)]

    def lk(k, shape):
        return jax.random.uniform(k, shape, jnp.float32, minval=0.01, maxval=1.0)

    likelihoods_list = [
        {
            "motion": {"y": lk(next(ki), (N, 8, 4, 4))},
            "residual": {"y": lk(next(ki), (N, 8, 4, 4)),
                         "z": lk(next(ki), (N, 8, 2, 2))},
        }
        for _ in range(num_frames)
    ]

    # ---- pure-JAX reference of the same semantics ----------------------
    num_pixels = H * W * num_frames
    scale = float((2 ** bitdepth - 1) ** 2)
    ref_mse = jnp.stack([
        jnp.mean((xh.astype(jnp.float32) - x.astype(jnp.float32)) ** 2,
                 axis=(1, 2, 3))
        for xh, x in zip(x_hat_list, target_list)
    ])                                                   # (F, N)
    ref_scaled = scale * ref_mse.mean(axis=0)            # (N,)
    ref_bpp_vec = jnp.zeros((N,), jnp.float32)
    for fl in likelihoods_list:
        for _lbl, fd in fl.items():
            for _f, v in fd.items():
                ref_bpp_vec = ref_bpp_vec + jnp.sum(
                    jnp.log(v), axis=(1, 2, 3)) / (-math.log(2) * num_pixels)
    ref = {
        "loss": (lmbda * ref_scaled).mean() + ref_bpp_vec.mean(),
        "mse_loss": ref_mse.mean(),
        "bpp_loss": ref_bpp_vec.mean(),
        "distortion": ref_scaled.mean(),
    }

    def check(out):
        jax.block_until_ready(out)
        for k_ in ("loss", "mse_loss", "bpp_loss", "distortion"):
            assert jnp.allclose(out[k_], ref[k_], rtol=1e-5, atol=1e-5), (
                k_, out[k_], ref[k_])

    # 1) default (single D block per reduction at these toy sizes)
    check(rate_distortion_loss(x_hat_list, target_list, likelihoods_list,
                               lmbda=lmbda, bitdepth=bitdepth))

    # 2) small D tile -> exercises multi-block accumulation + last-tile masking
    check(rate_distortion_loss(x_hat_list, target_list, likelihoods_list,
                               lmbda=lmbda, bitdepth=bitdepth, max_d_tile=256))

    # 3) bf16 reconstructions -> exercises native-dtype DMA + 16-row sublane tile
    x_hat_bf16 = [x.astype(jnp.bfloat16) for x in x_hat_list]
    ref_mse_b = jnp.stack([
        jnp.mean((xh.astype(jnp.float32) - x.astype(jnp.float32)) ** 2,
                 axis=(1, 2, 3))
        for xh, x in zip(x_hat_bf16, target_list)
    ])
    out_b = rate_distortion_loss(x_hat_bf16, target_list, likelihoods_list,
                                 lmbda=lmbda, bitdepth=bitdepth)
    jax.block_until_ready(out_b)
    assert jnp.allclose(out_b["mse_loss"], ref_mse_b.mean(),
                        rtol=1e-5, atol=1e-6)

    print("KERNEL_OK")
</pallas_src>

<mosaic_0001>
module attributes {stable_mosaic.version = 11 : i64} {
  func.func @_sse_kernel(%arg0: i32, %arg1: i32, %arg2: memref<8x1024xf32, #tpu.memory_space<vmem>>, %arg3: memref<8x1024xf32, #tpu.memory_space<vmem>>, %arg4: memref<8x1xf32, #tpu.memory_space<vmem>>, %arg5: memref<8x1024xf32, #tpu.memory_space<vmem>>) attributes {dimension_semantics = [#tpu.dimension_semantics<parallel>, #tpu.dimension_semantics<arbitrary>], iteration_bounds = array<i64: 1, 1>, scalar_prefetch = 0 : i64, scratch_operands = 1 : i64, tpu.core_type = #tpu.core_type<tc>, window_params = [{transform_indices = @transform_0, window_bounds = array<i64: 8, 1024>}, {transform_indices = @transform_1, window_bounds = array<i64: 8, 1024>}, {transform_indices = @transform_2, window_bounds = array<i64: 8, 1>}]} {
    %c0_i32 = arith.constant 0 : i32
    %0 = arith.cmpi eq, %arg1, %c0_i32 : i32
    %1 = arith.extui %0 : i1 to i32
    %c0_i32_0 = arith.constant 0 : i32
    %2 = arith.cmpi ne, %1, %c0_i32_0 : i32
    scf.if %2 {
      %cst = arith.constant 0.000000e+00 : f32
      %13 = vector.broadcast %cst : f32 to vector<8x1024xf32>
      %c0_10 = arith.constant 0 : index
      %c0_11 = arith.constant 0 : index
      %14 = vector.load %arg5[%c0_10, %c0_11] : memref<8x1024xf32, #tpu.memory_space<vmem>>, vector<8x1024xf32>
      tpu.vector_store %arg5[%c0_10, %c0_11], %13 {strides = array<i32>} : memref<8x1024xf32, #tpu.memory_space<vmem>>, vector<8x1024xf32>,
    } else {
    }
    %c0 = arith.constant 0 : index
    %c0_1 = arith.constant 0 : index
    %3 = vector.load %arg2[%c0, %c0_1] : memref<8x1024xf32, #tpu.memory_space<vmem>>, vector<8x1024xf32>
    %c0_2 = arith.constant 0 : index
    %c0_3 = arith.constant 0 : index
    %4 = vector.load %arg3[%c0_2, %c0_3] : memref<8x1024xf32, #tpu.memory_space<vmem>>, vector<8x1024xf32>
    %5 = arith.subf %3, %4 : vector<8x1024xf32>
    %6 = arith.mulf %5, %5 : vector<8x1024xf32>
    %c0_4 = arith.constant 0 : index
    %c0_5 = arith.constant 0 : index
    %7 = vector.load %arg5[%c0_4, %c0_5] : memref<8x1024xf32, #tpu.memory_space<vmem>>, vector<8x1024xf32>
    %8 = arith.addf %7, %6 : vector<8x1024xf32>
    %c0_6 = arith.constant 0 : index
    %c0_7 = arith.constant 0 : index
    %9 = vector.load %arg5[%c0_6, %c0_7] : memref<8x1024xf32, #tpu.memory_space<vmem>>, vector<8x1024xf32>
    tpu.vector_store %arg5[%c0_6, %c0_7], %8 {strides = array<i32>} : memref<8x1024xf32, #tpu.memory_space<vmem>>, vector<8x1024xf32>,
    %c0_i32_8 = arith.constant 0 : i32
    %10 = arith.cmpi eq, %arg1, %c0_i32_8 : i32
    %11 = arith.extui %10 : i1 to i32
    %c0_i32_9 = arith.constant 0 : i32
    %12 = arith.cmpi ne, %11, %c0_i32_9 : i32
    scf.if %12 {
      %c0_10 = arith.constant 0 : index
      %c0_11 = arith.constant 0 : index
      %13 = vector.load %arg5[%c0_10, %c0_11] : memref<8x1024xf32, #tpu.memory_space<vmem>>, vector<8x1024xf32>
      %cst = arith.constant dense<0.000000e+00> : vector<8xf32>
      %14 = vector.multi_reduction <add>, %13, %cst [1] : vector<8x1024xf32> to vector<8xf32>
      %15 = vector.shape_cast %14 : vector<8xf32> to vector<8x1xf32>
      %c0_12 = arith.constant 0 : index
      %c0_13 = arith.constant 0 : index
      %16 = vector.load %arg4[%c0_12, %c0_13] : memref<8x1xf32, #tpu.memory_space<vmem>>, vector<8x1xf32>
      tpu.vector_store %arg4[%c0_12, %c0_13], %15 {strides = array<i32>} : memref<8x1xf32, #tpu.memory_space<vmem>>, vector<8x1xf32>,
    } else {
    }
    return
  }
  func.func @transform_0(%arg0: i32, %arg1: i32) -> (i32, i32) {
    %c0_i32 = arith.constant 0 : i32
    return %arg0, %arg1 : i32, i32
  }
  func.func @transform_1(%arg0: i32, %arg1: i32) -> (i32, i32) {
    %c0_i32 = arith.constant 0 : i32
    return %arg0, %arg1 : i32, i32
  }
  func.func @transform_2(%arg0: i32, %arg1: i32) -> (i32, i32) {
    %c0_i32 = arith.constant 0 : i32
    %c0_i32_0 = arith.constant 0 : i32
    return %arg0, %c0_i32 : i32, i32
  }
}

</mosaic_0001>

<llo_original>
// kernel: tpu_custom_call.1
$region0: #{tpu_custom_call.1}
  #allocation0 [shape = 'u32[]', space=smem, size = 0x4, offset = 0x4, fixed_abs, tag = 'smem constant byte address 0x4 - core index']
  #allocation1 [shape = 'u32[144,128]{1,0:T(1,128)}', space=vmem, size = 0x12000, scoped, tag = 'internal scratch']
  #allocation2 [shape = 'f32[8,1024]{1,0:T(8,128)}', space=vmem, size = 0x8000, scoped, tag = 'scratch operand']
  %s0 = inlined_call_operand.hbm [shape: f32[4,1024], index: 0, kind: input, shape index: {}]
  %s1 = inlined_call_operand.hbm [shape: f32[4,1024], index: 1, kind: input, shape index: {}]
  %s2 = inlined_call_operand.vmem [shape: f32[8,1], index: 2, kind: output, shape index: {}]
  %s3 = sld [smem:[#allocation0]]
  $region34: #{tpu_custom_call.1} parent=0
    _
  %s5 = ssub.s32 1, %s3
  %s6 = scalar_select 0, %s5, %s3
  $region1: #{tpu_custom_call.1} parent=0
    #allocation3 [shape = 'u8[32768]{0}', space=vmem, size = 0x8000, scoped, tag = 'input window, operand 0, single buffered']
    #allocation4 [shape = 's32[1]{0}', space=sflag, size = 0x4, scoped, tag = 'scoped memory for tpu_custom_call.1']
    #allocation5 [shape = 'u8[32768]{0}', space=vmem, size = 0x8000, scoped, tag = 'input window, operand 1, single buffered']
    #allocation6 [shape = 's32[1]{0}', space=sflag, size = 0x4, scoped, tag = 'scoped memory for tpu_custom_call.1']
    %7 = vsyncpa [#allocation4], 0
    %8 = vsyncpa [#allocation6], 0
    // Predicated region
    $region2: #{tpu_custom_call.1} parent=1 // pred_check
      _
    $region3: #{tpu_custom_call.1} parent=1 // pred_check_branch
      %10 = sbr.rel (0) target = $region5
    $region4: #{tpu_custom_call.1} parent=1 // pred_region
      %s12 = ssub.s32 1024, 512
      %13 = vsyncadd [#allocation4], %s12
      %s14 = sshll.u32 [#allocation3], 4
      %s15 = int_to_ptr.vmem [resolvable:$true] %s14
      %20 = dma.hbm_to_vmem [thread:$0]  %s0, 512, %s15, [#allocation4], 512, 512, 32
    $region5: #{tpu_custom_call.1} parent=1 // pred_fallthru
      _
    // Predicated region
    $region6: #{tpu_custom_call.1} parent=1 // pred_check
      _
    $region7: #{tpu_custom_call.1} parent=1 // pred_check_branch
      %22 = sbr.rel (0) target = $region9
    $region8: #{tpu_custom_call.1} parent=1 // pred_region
      %s24 = ssub.s32 1024, 512
      %25 = vsyncadd [#allocation6], %s24
      %s26 = sshll.u32 [#allocation5], 4
      %s27 = int_to_ptr.vmem [resolvable:$true] %s26
      %32 = dma.hbm_to_vmem [thread:$0]  %s1, 512, %s27, [#allocation6], 512, 512, 32
    $region9: #{tpu_custom_call.1} parent=1 // pred_fallthru
      _
    // Predicated region
    $region10: #{tpu_custom_call.1} parent=1 // pred_check
      _
    $region11: #{tpu_custom_call.1} parent=1 // pred_check_branch
      %34 = sbr.rel (0) target = $region13
    $region12: #{tpu_custom_call.1} parent=1 // pred_region
      %35 = dma.done [#allocation4], 1024
    $region13: #{tpu_custom_call.1} parent=1 // pred_fallthru
      _
    // Predicated region
    $region14: #{tpu_custom_call.1} parent=1 // pred_check
      _
    $region15: #{tpu_custom_call.1} parent=1 // pred_check_branch
      %37 = sbr.rel (0) target = $region17
    $region16: #{tpu_custom_call.1} parent=1 // pred_region
      %38 = dma.done [#allocation6], 1024
    $region17: #{tpu_custom_call.1} parent=1 // pred_fallthru
      _
    %p39 = scmp.eq.s32.totalorder 0, 0
    // Predicated region
    $region18: #{tpu_custom_call.1} parent=1 // pred_check
      %p40 = pneg %p39
    $region19: #{tpu_custom_call.1} parent=1 // pred_check_branch
      %42 = sbr.rel (%p40) target = $region21
    $region20: #{tpu_custom_call.1} parent=1 // pred_region
      %43 = vst [vmem:[#allocation2] sm:$0xff] 0.0
      %44 = vst [vmem:[#allocation2 + $0x8] sm:$0xff] 0.0
      %45 = vst [vmem:[#allocation2 + $0x10] sm:$0xff] 0.0
      %46 = vst [vmem:[#allocation2 + $0x18] sm:$0xff] 0.0
      %47 = vst [vmem:[#allocation2 + $0x20] sm:$0xff] 0.0
      %48 = vst [vmem:[#allocation2 + $0x28] sm:$0xff] 0.0
      %49 = vst [vmem:[#allocation2 + $0x30] sm:$0xff] 0.0
      %50 = vst [vmem:[#allocation2 + $0x38] sm:$0xff] 0.0
    $region21: #{tpu_custom_call.1} parent=1 // pred_fallthru
      _
    %v51 = vld [vmem:[#allocation3] sm:$0xff]
    %v52 = vld [vmem:[#allocation3 + $0x8] sm:$0xff]
    %v53 = vld [vmem:[#allocation3 + $0x10] sm:$0xff]
    %v54 = vld [vmem:[#allocation3 + $0x18] sm:$0xff]
    %v55 = vld [vmem:[#allocation3 + $0x20] sm:$0xff]
    %v56 = vld [vmem:[#allocation3 + $0x28] sm:$0xff]
    %v57 = vld [vmem:[#allocation3 + $0x30] sm:$0xff]
    %v58 = vld [vmem:[#allocation3 + $0x38] sm:$0xff]
    %v59 = vld [vmem:[#allocation5] sm:$0xff]
    %v60 = vld [vmem:[#allocation5 + $0x8] sm:$0xff]
    %v61 = vld [vmem:[#allocation5 + $0x10] sm:$0xff]
    %v62 = vld [vmem:[#allocation5 + $0x18] sm:$0xff]
    %v63 = vld [vmem:[#allocation5 + $0x20] sm:$0xff]
    %v64 = vld [vmem:[#allocation5 + $0x28] sm:$0xff]
    %v65 = vld [vmem:[#allocation5 + $0x30] sm:$0xff]
    %v66 = vld [vmem:[#allocation5 + $0x38] sm:$0xff]
    %v67 = vsub.f32 %v51, %v59
    %v68 = vsub.f32 %v52, %v60
    %v69 = vsub.f32 %v53, %v61
    %v70 = vsub.f32 %v54, %v62
    %v71 = vsub.f32 %v55, %v63
    %v72 = vsub.f32 %v56, %v64
    %v73 = vsub.f32 %v57, %v65
    %v74 = vsub.f32 %v58, %v66
    %v75 = vmul.f32 %v67, %v67
    %v76 = vmul.f32 %v68, %v68
    %v77 = vmul.f32 %v69, %v69
    %v78 = vmul.f32 %v70, %v70
    %v79 = vmul.f32 %v71, %v71
    %v80 = vmul.f32 %v72, %v72
    %v81 = vmul.f32 %v73, %v73
    %v82 = vmul.f32 %v74, %v74
    %v83 = vld [vmem:[#allocation2] sm:$0xff]
    %v84 = vld [vmem:[#allocation2 + $0x8] sm:$0xff]
    %v85 = vld [vmem:[#allocation2 + $0x10] sm:$0xff]
    %v86 = vld [vmem:[#allocation2 + $0x18] sm:$0xff]
    %v87 = vld [vmem:[#allocation2 + $0x20] sm:$0xff]
    %v88 = vld [vmem:[#allocation2 + $0x28] sm:$0xff]
    %v89 = vld [vmem:[#allocation2 + $0x30] sm:$0xff]
    %v90 = vld [vmem:[#allocation2 + $0x38] sm:$0xff]
    %v99 = vcombine.low %v75, %v79
    %v100 = vcombine.high %v75, %v79
    %v101 = vcombine.low %v76, %v80
    %v102 = vcombine.high %v76, %v80
    %v103 = vcombine.low %v77, %v81
    %v104 = vcombine.high %v77, %v81
    %v105 = vcombine.low %v78, %v82
    %v106 = vcombine.high %v78, %v82
    %v115 = vadd.f32 %v83, %v99
    %v116 = vadd.f32 %v84, %v100
    %v117 = vadd.f32 %v85, %v101
    %v118 = vadd.f32 %v86, %v102
    %v119 = vadd.f32 %v87, %v103
    %v120 = vadd.f32 %v88, %v104
    %v121 = vadd.f32 %v89, %v105
    %v122 = vadd.f32 %v90, %v106
    %123 = vst [vmem:[#allocation2] sm:$0xff] %v115
    %124 = vst [vmem:[#allocation2 + $0x8] sm:$0xff] %v116
    %125 = vst [vmem:[#allocation2 + $0x10] sm:$0xff] %v117
    %126 = vst [vmem:[#allocation2 + $0x18] sm:$0xff] %v118
    %127 = vst [vmem:[#allocation2 + $0x20] sm:$0xff] %v119
    %128 = vst [vmem:[#allocation2 + $0x28] sm:$0xff] %v120
    %129 = vst [vmem:[#allocation2 + $0x30] sm:$0xff] %v121
    %130 = vst [vmem:[#allocation2 + $0x38] sm:$0xff] %v122
    // Predicated region
    $region22: #{tpu_custom_call.1} parent=1 // pred_check
      %p131 = pneg %p39
    $region23: #{tpu_custom_call.1} parent=1 // pred_check_branch
      %133 = sbr.rel (%p131) target = $region25
    $region24: #{tpu_custom_call.1} parent=1 // pred_region
      %v134 = vld [vmem:[#allocation2] sm:$0xff]
      %v135 = vld [vmem:[#allocation2 + $0x8] sm:$0xff]
      %v136 = vld [vmem:[#allocation2 + $0x10] sm:$0xff]
      %v137 = vld [vmem:[#allocation2 + $0x18] sm:$0xff]
      %v138 = vld [vmem:[#allocation2 + $0x20] sm:$0xff]
      %v139 = vld [vmem:[#allocation2 + $0x28] sm:$0xff]
      %v140 = vld [vmem:[#allocation2 + $0x30] sm:$0xff]
      %v141 = vld [vmem:[#allocation2 + $0x38] sm:$0xff]
      %v142 = vadd.f32 %v134, %v135
      %v143 = vadd.f32 %v142, %v136
      %v144 = vadd.f32 %v143, %v137
      %v145 = vadd.f32 %v144, %v138
      %v146 = vadd.f32 %v145, %v139
      %v147 = vadd.f32 %v146, %v140
      %v148 = vadd.f32 %v147, %v141
      %149 = vadd.xlane.f32.xlu0 %v148
      %v150 = vpop.xlane.xlu0 %149
      %vm151 = vcmask 7168
      %152 = vst.msk [vmem:[%s2] sm:$0xff] %vm151, %v150
    $region25: #{tpu_custom_call.1} parent=1 // pred_fallthru
      _
    // Predicated region
    $region26: #{tpu_custom_call.1} parent=1 // pred_check
      _
    $region27: #{tpu_custom_call.1} parent=1 // pred_check_branch
      %154 = sbr.rel (0) target = $region29
    $region28: #{tpu_custom_call.1} parent=1 // pred_region
      _
    $region29: #{tpu_custom_call.1} parent=1 // pred_fallthru
      _
    // Predicated region
    $region30: #{tpu_custom_call.1} parent=1 // pred_check
      _
    $region31: #{tpu_custom_call.1} parent=1 // pred_check_branch
      %156 = sbr.rel (0) target = $region33
    $region32: #{tpu_custom_call.1} parent=1 // pred_region
      _
    $region33: #{tpu_custom_call.1} parent=1 // pred_fallthru
      _
    %157 = vsyncpa [#allocation4], 1
    %158 = vsyncpa [#allocation6], 1

</llo_original>
